<compile_context>
chip_gen: v7x
topology: tpu7x:2x2x1
jax: 0.10.0
libtpu: 0.0.40
codegen_flags: <defaults>
</compile_context>

<pallas_src>
import math
import jax
import jax.numpy as jnp
from jax.experimental import pallas as pl
from jax.experimental.pallas import tpu as pltpu

LANE = 128


def _round_up(x, m):
    return ((x + m - 1) // m) * m


def _pad2(x, rows, cols):
    r, c = x.shape
    return jnp.pad(x, ((0, rows - r), (0, cols - c)))


def _agg_vmem_bytes(tile_m, tile_k, f_wide):
    """Actual VMEM need of the aggregation kernels + slack (review: don't blanket 48 MiB)."""
    a = 2 * tile_m * tile_k * 2          # double-buffered bf16 A tile
    xw = 2 * tile_k * f_wide * 2         # double-buffered bf16 XW K-tile
    out = 2 * tile_m * f_wide * 4        # double-buffered output tile (worst case f32)
    acc = tile_m * f_wide * 4            # f32 accumulator scratch
    deg = 2 * tile_m * LANE * 4          # (tile_m, 1) blocks are lane-padded in VMEM
    small = 4 * f_wide * f_wide * 2      # resident W2 / biases
    slack = 8 * 1024 * 1024
    return min(64 * 1024 * 1024, a + xw + out + acc + deg + small + slack)


# ----------------------------------------------------------------------------
# Feature transform  XW1 = X @ W1   (computed once, emitted as bf16)
# ----------------------------------------------------------------------------
def xw_kernel(x_ref, w_ref, o_ref):
    o_ref[...] = jnp.dot(
        x_ref[...], w_ref[...], preferred_element_type=jnp.float32
    ).astype(o_ref.dtype)


def feature_transform(x, w, *, tile_m):
    n, f_in = x.shape
    f_out = w.shape[1]
    assert n % tile_m == 0 and f_out % LANE == 0
    return pl.pallas_call(
        xw_kernel,
        out_shape=jax.ShapeDtypeStruct((n, f_out), jnp.bfloat16),
        grid_spec=pltpu.PrefetchScalarGridSpec(
            num_scalar_prefetch=0,
            grid=(n // tile_m,),
            in_specs=[
                pl.BlockSpec((tile_m, f_in), lambda i: (i, 0)),   # X row tile (bf16)
                pl.BlockSpec((f_in, f_out), lambda i: (0, 0)),    # full (padded) W (bf16)
            ],
            out_specs=pl.BlockSpec((tile_m, f_out), lambda i: (i, 0)),
        ),
        compiler_params=pltpu.CompilerParams(
            dimension_semantics=("parallel",),
        ),
    )(x, w)


# ----------------------------------------------------------------------------
# Layer 1 (fused):  XW2 = relu( (1/max(deg,1)) * (A @ XW1) + b1 ) @ W2
#   also emits norm = 1/max(deg,1) for reuse in layer 2.
#   grid = (dst-row tiles, src/K tiles), K last and "arbitrary".
# ----------------------------------------------------------------------------
def gcn_agg_fused_kernel(a_ref, xw_ref, b1_ref, w2_ref, o_ref, norm_ref, acc_ref, deg_ref):
    k = pl.program_id(1)

    @pl.when(k == 0)
    def _():
        acc_ref[...] = jnp.zeros_like(acc_ref)
        deg_ref[...] = jnp.zeros_like(deg_ref)

    a = a_ref[...]  # bf16 0/1 -> fed straight to the bf16 MXU path
    acc_ref[...] += jnp.dot(a, xw_ref[...], preferred_element_type=jnp.float32)
    # In-degree: f32 reduction (bf16 sums lose exactness above 256). Only done in layer 1.
    deg_ref[...] += jnp.sum(a.astype(jnp.float32), axis=1, keepdims=True)

    @pl.when(k == pl.num_programs(1) - 1)
    def _():
        norm = pl.reciprocal(jnp.maximum(deg_ref[...], 1.0), approx=True)
        norm_ref[...] = norm
        h1 = jnp.maximum(acc_ref[...] * norm + b1_ref[...], 0.0)
        # Layer-2 feature transform fused here: H1 never hits HBM.
        o_ref[...] = jnp.dot(
            h1.astype(jnp.bfloat16), w2_ref[...], preferred_element_type=jnp.float32
        ).astype(o_ref.dtype)


def gcn_agg_fused_layer1(a, xw1, b1, w2, *, tile_m, tile_k):
    n = a.shape[0]
    hid = xw1.shape[1]
    out = w2.shape[1]
    assert n % tile_m == 0 and n % tile_k == 0
    assert hid % LANE == 0 and out % LANE == 0
    return pl.pallas_call(
        gcn_agg_fused_kernel,
        out_shape=(
            jax.ShapeDtypeStruct((n, out), jnp.bfloat16),   # XW2 (lane-dense, bf16)
            jax.ShapeDtypeStruct((n, 1), jnp.float32),      # norm = 1/max(deg,1)
        ),
        grid_spec=pltpu.PrefetchScalarGridSpec(
            num_scalar_prefetch=0,
            grid=(n // tile_m, n // tile_k),
            in_specs=[
                pl.BlockSpec((tile_m, tile_k), lambda i, k: (i, k)),  # A tile (bf16)
                pl.BlockSpec((tile_k, hid), lambda i, k: (k, 0)),     # XW1 K-tile (bf16)
                pl.BlockSpec((1, hid), lambda i, k: (0, 0)),          # b1 (f32, padded)
                pl.BlockSpec((hid, out), lambda i, k: (0, 0)),        # W2 (bf16, resident)
            ],
            out_specs=(
                pl.BlockSpec((tile_m, out), lambda i, k: (i, 0)),
                pl.BlockSpec((tile_m, 1), lambda i, k: (i, 0)),
            ),
            scratch_shapes=[
                pltpu.VMEM((tile_m, hid), jnp.float32),  # f32 accumulator for A @ XW1
                pltpu.VMEM((tile_m, 1), jnp.float32),    # f32 in-degree accumulator
            ],
        ),
        compiler_params=pltpu.CompilerParams(
            dimension_semantics=("parallel", "arbitrary"),
            vmem_limit_bytes=_agg_vmem_bytes(tile_m, tile_k, max(hid, out)),
        ),
    )(a, xw1, b1, w2)


# ----------------------------------------------------------------------------
# Layer 2:  out = relu( norm * (A @ XW2) + b2 )   (norm reused from layer 1)
#   f32 output -> accumulate directly into o_ref, no scratch accumulator.
# ----------------------------------------------------------------------------
def gcn_agg_final_kernel(a_ref, xw_ref, b2_ref, norm_ref, o_ref):
    k = pl.program_id(1)

    @pl.when(k == 0)
    def _():
        o_ref[...] = jnp.zeros_like(o_ref)

    o_ref[...] += jnp.dot(a_ref[...], xw_ref[...], preferred_element_type=jnp.float32)

    @pl.when(k == pl.num_programs(1) - 1)
    def _():
        o_ref[...] = jnp.maximum(o_ref[...] * norm_ref[...] + b2_ref[...], 0.0)


def gcn_agg_layer2(a, xw2, b2, norm, *, tile_m, tile_k):
    n = a.shape[0]
    out = xw2.shape[1]
    assert n % tile_m == 0 and n % tile_k == 0 and out % LANE == 0
    return pl.pallas_call(
        gcn_agg_final_kernel,
        out_shape=jax.ShapeDtypeStruct((n, out), jnp.float32),
        grid_spec=pltpu.PrefetchScalarGridSpec(
            num_scalar_prefetch=0,
            grid=(n // tile_m, n // tile_k),
            in_specs=[
                pl.BlockSpec((tile_m, tile_k), lambda i, k: (i, k)),  # A tile (bf16)
                pl.BlockSpec((tile_k, out), lambda i, k: (k, 0)),     # XW2 K-tile (bf16)
                pl.BlockSpec((1, out), lambda i, k: (0, 0)),          # b2 (f32, padded)
                pl.BlockSpec((tile_m, 1), lambda i, k: (i, 0)),       # norm (f32)
            ],
            out_specs=pl.BlockSpec((tile_m, out), lambda i, k: (i, 0)),
        ),
        compiler_params=pltpu.CompilerParams(
            dimension_semantics=("parallel", "arbitrary"),
            vmem_limit_bytes=_agg_vmem_bytes(tile_m, tile_k, out),
        ),
    )(a, xw2, b2, norm)


# ----------------------------------------------------------------------------
# Graph / parameter preparation (done ONCE, outside the per-forward hot path)
# ----------------------------------------------------------------------------
def prepare_gcn(adj, params, *, tile_m=512, tile_k=512):
    n = adj.shape[0]
    in_dim = params["w1"].shape[0]
    hidden_dim = params["w1"].shape[1]
    out_dim = params["w2"].shape[1]

    n_pad = _round_up(n, math.lcm(tile_m, tile_k))
    hid_pad = _round_up(hidden_dim, LANE)
    out_pad = _round_up(out_dim, LANE)

    return {
        "n": n, "n_pad": n_pad, "in_dim": in_dim,
        "hid_pad": hid_pad, "out_pad": out_pad, "out_dim": out_dim,
        "tile_m": tile_m, "tile_k": tile_k,
        # bf16 A holds 0/1 exactly; padded/cast once here, not per forward.
        "a": _pad2(adj, n_pad, n_pad).astype(jnp.bfloat16),
        "w1": _pad2(params["w1"], in_dim, hid_pad).astype(jnp.bfloat16),
        "b1": _pad2(params["b1"], 1, hid_pad).astype(jnp.float32),
        "w2": _pad2(params["w2"], hid_pad, out_pad).astype(jnp.bfloat16),
        "b2": _pad2(params["b2"], 1, out_pad).astype(jnp.float32),
    }


def gcn_dgl_forward(prep, features):
    n, n_pad = prep["n"], prep["n_pad"]
    tm, tk = prep["tile_m"], prep["tile_k"]

    x_p = _pad2(features, n_pad, features.shape[1]).astype(jnp.bfloat16)

    # Layer 1: XW1 once, then K-tiled aggregation with fused norm/bias/relu AND the
    # layer-2 feature transform in the epilogue (emits XW2 directly, bf16).
    xw1 = feature_transform(x_p, prep["w1"], tile_m=tm)
    xw2, norm = gcn_agg_fused_layer1(prep["a"], xw1, prep["b1"], prep["w2"],
                                     tile_m=tm, tile_k=tk)

    # Layer 2: K-tiled aggregation reusing norm; f32 output, accumulate in-place.
    out = gcn_agg_layer2(prep["a"], xw2, prep["b2"], norm, tile_m=tm, tile_k=tk)

    return out[:n, :prep["out_dim"]]


def reference_forward(adj, features, params):
    deg = jnp.sum(adj, axis=1, keepdims=True)
    norm = 1.0 / jnp.maximum(deg, 1.0)
    h = jnp.maximum(norm * (adj @ (features @ params["w1"])) + params["b1"], 0.0)
    o = jnp.maximum(norm * (adj @ (h @ params["w2"])) + params["b2"], 0.0)
    return o


if __name__ == "__main__":
    # Small synthetic graph: N nodes, in_dim -> hidden_dim -> out_dim.
    # N deliberately not a multiple of the tile; small tiles to exercise the 2x2 grid.
    N, in_dim, hidden_dim, out_dim = 300, 16, 32, 8
    tile_m, tile_k = 256, 256   # use 512-1024 on real graphs

    key = jax.random.PRNGKey(0)
    k_adj, k_feat, k_w1, k_w2 = jax.random.split(key, 4)

    # Deterministic dense adjacency (float 0/1), plus self-loops so degrees >= 1.
    adj = (jax.random.uniform(k_adj, (N, N)) < 0.05).astype(jnp.float32)
    adj = jnp.maximum(adj, jnp.eye(N, dtype=jnp.float32))

    features = jax.random.normal(k_feat, (N, in_dim), dtype=jnp.float32)

    params = {
        "w1": jax.random.normal(k_w1, (in_dim, hidden_dim), dtype=jnp.float32)
        * (1.0 / jnp.sqrt(in_dim)),
        "b1": jnp.zeros((1, hidden_dim), dtype=jnp.float32),
        "w2": jax.random.normal(k_w2, (hidden_dim, out_dim), dtype=jnp.float32)
        * (1.0 / jnp.sqrt(hidden_dim)),
        "b2": jnp.zeros((1, out_dim), dtype=jnp.float32),
    }

    prep = prepare_gcn(adj, params, tile_m=tile_m, tile_k=tile_k)
    out = jax.block_until_ready(gcn_dgl_forward(prep, features))

    ref = reference_forward(adj, features, params)
    assert out.shape == (N, out_dim)
    # bf16 weights/activations in the kernel path vs. f32 reference: allow ~bf16-level error.
    err = float(jnp.max(jnp.abs(out - ref)))
    scale = float(jnp.max(jnp.abs(ref)))
    assert err <= 5e-2 * scale + 1e-3, (err, scale)

    print("KERNEL_OK")
</pallas_src>

<mosaic_0001>
module attributes {stable_mosaic.version = 11 : i64} {
  func.func @xw_kernel(%arg0: i32, %arg1: memref<256x16xbf16, #tpu.memory_space<vmem>>, %arg2: memref<16x128xbf16, #tpu.memory_space<vmem>>, %arg3: memref<256x128xbf16, #tpu.memory_space<vmem>>) attributes {dimension_semantics = [#tpu.dimension_semantics<parallel>], iteration_bounds = array<i64: 2>, scalar_prefetch = 0 : i64, scratch_operands = 0 : i64, tpu.core_type = #tpu.core_type<tc>, window_params = [{transform_indices = @transform_0, window_bounds = array<i64: 256, 16>}, {pipeline_mode = #tpu.pipeline_mode<synchronous>, transform_indices = @transform_1, window_bounds = array<i64: 16, 128>}, {transform_indices = @transform_2, window_bounds = array<i64: 256, 128>}]} {
    %c0 = arith.constant 0 : index
    %c0_0 = arith.constant 0 : index
    %0 = vector.load %arg1[%c0, %c0_0] : memref<256x16xbf16, #tpu.memory_space<vmem>>, vector<256x16xbf16>
    %c0_1 = arith.constant 0 : index
    %c0_2 = arith.constant 0 : index
    %1 = vector.load %arg2[%c0_1, %c0_2] : memref<16x128xbf16, #tpu.memory_space<vmem>>, vector<16x128xbf16>
    %cst = arith.constant dense<0.000000e+00> : vector<256x128xf32>
    %2 = tpu.matmul %0, %1, %cst {dimension_numbers = #tpu.dot_dimension_numbers<[1], [0], [0], [1], [0, 0, 1, 1], [], []>} : vector<256x16xbf16>, vector<16x128xbf16>, vector<256x128xf32> -> vector<256x128xf32>
    %3 = arith.truncf %2 : vector<256x128xf32> to vector<256x128xbf16>
    %c0_3 = arith.constant 0 : index
    %c0_4 = arith.constant 0 : index
    %4 = vector.load %arg3[%c0_3, %c0_4] : memref<256x128xbf16, #tpu.memory_space<vmem>>, vector<256x128xbf16>
    tpu.vector_store %arg3[%c0_3, %c0_4], %3 {strides = array<i32>} : memref<256x128xbf16, #tpu.memory_space<vmem>>, vector<256x128xbf16>,
    return
  }
  func.func @transform_0(%arg0: i32) -> (i32, i32) {
    %c0_i32 = arith.constant 0 : i32
    %c0_i32_0 = arith.constant 0 : i32
    return %arg0, %c0_i32 : i32, i32
  }
  func.func @transform_1(%arg0: i32) -> (i32, i32) {
    %c0_i32 = arith.constant 0 : i32
    %c0_i32_0 = arith.constant 0 : i32
    %c0_i32_1 = arith.constant 0 : i32
    return %c0_i32, %c0_i32_0 : i32, i32
  }
  func.func @transform_2(%arg0: i32) -> (i32, i32) {
    %c0_i32 = arith.constant 0 : i32
    %c0_i32_0 = arith.constant 0 : i32
    return %arg0, %c0_i32 : i32, i32
  }
}

</mosaic_0001>

<llo_original>
// kernel: tpu_custom_call.1
$region0: #{tpu_custom_call.1}
  #allocation0 [shape = 'u32[]', space=smem, size = 0x4, offset = 0x4, fixed_abs, tag = 'smem constant byte address 0x4 - core index']
  #allocation1 [shape = 'u32[144,128]{1,0:T(1,128)}', space=vmem, size = 0x12000, scoped, tag = 'internal scratch']
  %s0 = inlined_call_operand.vmem [shape: bf16[512,16], index: 0, kind: input, shape index: {}]
  %s1 = inlined_call_operand.vmem [shape: bf16[16,128], index: 1, kind: input, shape index: {}]
  %s2 = inlined_call_operand.hbm [shape: bf16[512,128], index: 2, kind: output, shape index: {}]
  %s3 = sld [smem:[#allocation0]]
  $region41: #{tpu_custom_call.1} parent=0
    _
  %s5 = ssub.s32 1, %s3
  %s6 = scalar_select 0, %s5, %s3
  $region1: #{tpu_custom_call.1} parent=0
    #allocation2 [shape = 'u8[131072]{0}', space=vmem, size = 0x20000, scoped, tag = 'output window, operand 0']
    #allocation3 [shape = 's32[2]{0}', space=sflag, size = 0x8, scoped, tag = 'scoped memory for tpu_custom_call.1']
    %7 = vsyncpa [#allocation3], 0
    %s8 = scalar_lea.sflag [#allocation3], 1
    %9 = vsyncpa %s8, 0
    loop: start=0, step=1, limit=4
    $region2: #{tpu_custom_call.1} parent=1 // loop_pre_header
      _
    $region3: #{tpu_custom_call.1} parent=1 // loop_header
      %s11 = sphi 0, %s15
      %p12 = scmp.ge.s32.totalorder %s11, 4
      %s21 = sphi 0, %s23
      %s24 = sphi 0, %s21
      %s25 = sphi 0, %s24
      %s41 = sphi 0, %s25
      %s45 = sphi 0, %s45
      %s47 = sphi 0, %s45
      %s48 = sphi 0, %s47
      %s62 = sphi 0, %s48
      %s68 = sphi 0, %s70
      %s71 = sphi 0, %s68
      %s72 = sphi 0, %s71
      %s88 = sphi 0, %s72
    $region4: #{tpu_custom_call.1} parent=1 // loop_header_branch
      %14 = sbr.rel (%p12) target = $region8
    $region5: #{tpu_custom_call.1} parent=1 // loop_body
      %s16 = ssub.s32 %s11, 1
      %s17 = ssub.s32 %s11, 2
      %s18 = sadd.s32 %s11, 1
      %s19 = ssub.s32 %s11, %s18
      %p20 = scmp.eq.s32.totalorder %s19, 0
      %s22 = sadd.s32 %s21, 1
      %s23 = scalar_select %p20, %s21, %s22
      %p26 = pneg %p20
      %p27 = scmp.eq.s32.totalorder %s11, 1
      %p28 = por %p26, %p27
      %p29 = scmp.ne.s32.totalorder %s21, %s24
      %p30 = scmp.eq.s32.totalorder %s11, 0
      %p31 = por %p29, %p30
      %p32 = scmp.ne.s32.totalorder %s21, %s24
      %p33 = scmp.eq.s32.totalorder %s16, 1
      %p34 = por %p32, %p33
      %p35 = scmp.ne.s32.totalorder %s24, %s25
      %p36 = scmp.eq.s32.totalorder %s16, 0
      %p37 = por %p35, %p36
      %p38 = scmp.ne.s32.totalorder %s24, %s25
      %p39 = scmp.eq.s32.totalorder %s17, 1
      %p40 = por %p38, %p39
      %p42 = scmp.ne.s32.totalorder %s25, %s41
      %p43 = scmp.eq.s32.totalorder %s17, 0
      %p44 = por %p42, %p43
      %s46 = sadd.s32 %s45, 1
      %p49 = scmp.eq.s32.totalorder %s11, 1
      %p50 = scmp.ne.s32.totalorder %s45, %s47
      %p51 = scmp.eq.s32.totalorder %s11, 0
      %p52 = por %p50, %p51
      %p53 = scmp.ne.s32.totalorder %s45, %s47
      %p54 = scmp.eq.s32.totalorder %s16, 1
      %p55 = por %p53, %p54
      %p56 = scmp.ne.s32.totalorder %s47, %s48
      %p57 = scmp.eq.s32.totalorder %s16, 0
      %p58 = por %p56, %p57
      %p59 = scmp.ne.s32.totalorder %s47, %s48
      %p60 = scmp.eq.s32.totalorder %s17, 1
      %p61 = por %p59, %p60
      %p63 = scmp.ne.s32.totalorder %s48, %s62
      %p64 = scmp.eq.s32.totalorder %s17, 0
      %p65 = por %p63, %p64
      %s66 = ssub.s32 %s11, %s18
      %p67 = scmp.eq.s32.totalorder %s66, 0
      %s69 = sadd.s32 %s68, 1
      %s70 = scalar_select %p67, %s68, %s69
      %p73 = pneg %p67
      %p74 = scmp.eq.s32.totalorder %s11, 1
      %p75 = por %p73, %p74
      %p76 = scmp.ne.s32.totalorder %s68, %s71
      %p77 = scmp.eq.s32.totalorder %s11, 0
      %p78 = por %p76, %p77
      %p79 = scmp.ne.s32.totalorder %s68, %s71
      %p80 = scmp.eq.s32.totalorder %s16, 1
      %p81 = por %p79, %p80
      %p82 = scmp.ne.s32.totalorder %s71, %s72
      %p83 = scmp.eq.s32.totalorder %s16, 0
      %p84 = por %p82, %p83
      %p85 = scmp.ne.s32.totalorder %s71, %s72
      %p86 = scmp.eq.s32.totalorder %s17, 1
      %p87 = por %p85, %p86
      %p89 = scmp.ne.s32.totalorder %s72, %s88
      %p90 = scmp.eq.s32.totalorder %s17, 0
      %p91 = por %p89, %p90
      %p92 = scmp.le.s32.totalorder 1, %s11
      %p93 = scmp.lt.s32.totalorder %s11, 3
      %p94 = pnand %p92, %p93
      %p95 = pneg %p94
      // Predicated region
      $region9: #{tpu_custom_call.1} parent=5 // pred_check
        _
      $region10: #{tpu_custom_call.1} parent=5 // pred_check_branch
        %97 = sbr.rel (%p94) target = $region12
      $region11: #{tpu_custom_call.1} parent=5 // pred_region
        %s98 = ssub.s32 %s11, 1
        // Predicated region
        $region13: #{tpu_custom_call.1} parent=11 // pred_check
          %p99 = pneg %p58
        $region14: #{tpu_custom_call.1} parent=11 // pred_check_branch
          %101 = sbr.rel (%p99) target = $region16
        $region15: #{tpu_custom_call.1} parent=11 // pred_region
          _
        $region16: #{tpu_custom_call.1} parent=11 // pred_fallthru
          _
      $region12: #{tpu_custom_call.1} parent=5 // pred_fallthru
        _
      %p102 = scmp.lt.s32.totalorder %s11, 2
      // Predicated region
      $region17: #{tpu_custom_call.1} parent=5 // pred_check
        %p103 = pneg %p102
      $region18: #{tpu_custom_call.1} parent=5 // pred_check_branch
        %105 = sbr.rel (%p103) target = $region20
      $region19: #{tpu_custom_call.1} parent=5 // pred_region
        // Predicated region
        $region21: #{tpu_custom_call.1} parent=19 // pred_check
          %p106 = pneg %p31
        $region22: #{tpu_custom_call.1} parent=19 // pred_check_branch
          %108 = sbr.rel (%p106) target = $region24
        $region23: #{tpu_custom_call.1} parent=19 // pred_region
          %s109 = smul.u32 32, %s11
          %p110 = scmp.lt.s32.totalorder %s109, 63
          %s111 = scalar_select %p110, %s109, 63
          %s112 = smul.addr %s111, 4
          %s113 = scalar_lea.vmem %s0, %s112
          %s114 = smul.u32 32, %s11
        $region24: #{tpu_custom_call.1} parent=19 // pred_fallthru
          _
      $region20: #{tpu_custom_call.1} parent=5 // pred_fallthru
        _
      %p115 = scmp.le.s32.totalorder 1, %s11
      %p116 = scmp.lt.s32.totalorder %s11, 3
      %p117 = pnand %p115, %p116
      %p118 = pneg %p117
      // Predicated region
      $region25: #{tpu_custom_call.1} parent=5 // pred_check
        _
      $region26: #{tpu_custom_call.1} parent=5 // pred_check_branch
        %120 = sbr.rel (%p117) target = $region28
      $region27: #{tpu_custom_call.1} parent=5 // pred_region
        %s121 = ssub.s32 %s11, 1
        %s122 = smul.u32 32, %s16
        %p123 = scmp.lt.s32.totalorder %s122, 63
        %s124 = scalar_select %p123, %s122, 63
        %s125 = smul.addr %s124, 4
        %s126 = scalar_lea.vmem %s0, %s125
        %p127 = pneg %p37
        %p128 = pneg %p34
        %p129 = pneg %p58
        %p130 = pneg %p55
        %p131 = pneg %p84
        %p132 = pneg %p81
        %s133 = sand.u32 %s71, 1
        %s134 = scalar_lea.sflag [#allocation3], %s133
        %s135 = sand.u32 %s71, 1
        %s136 = smul.addr %s135, 128
        %s137 = scalar_lea.vmem [#allocation2], %s136
        %s138 = smul.u32 32, %s16
        %p139 = scmp.lt.s32.totalorder %s138, 63
        %s140 = scalar_select %p139, %s138, 63
        %s141 = smul.addr %s140, 4
        %s142 = scalar_lea.vmem %s0, %s141
        %s143 = smul.u32 32, %s16
        %s144 = smul.u32 32, %s16
        %v146 = vld [vmem:[%s142] sm:$0xf]
        %v147 = vld [vmem:[%s142 + $0x4] sm:$0xf]
        %v148 = vld [vmem:[%s142 + $0x8] sm:$0xf]
        %v149 = vld [vmem:[%s142 + $0xc] sm:$0xf]
        %v150 = vld [vmem:[%s142 + $0x10] sm:$0xf]
        %v151 = vld [vmem:[%s142 + $0x14] sm:$0xf]
        %v152 = vld [vmem:[%s142 + $0x18] sm:$0xf]
        %v153 = vld [vmem:[%s142 + $0x1c] sm:$0xf]
        %v154 = vld [vmem:[%s142 + $0x20] sm:$0xf]
        %v155 = vld [vmem:[%s142 + $0x24] sm:$0xf]
        %v156 = vld [vmem:[%s142 + $0x28] sm:$0xf]
        %v157 = vld [vmem:[%s142 + $0x2c] sm:$0xf]
        %v158 = vld [vmem:[%s142 + $0x30] sm:$0xf]
        %v159 = vld [vmem:[%s142 + $0x34] sm:$0xf]
        %v160 = vld [vmem:[%s142 + $0x38] sm:$0xf]
        %v161 = vld [vmem:[%s142 + $0x3c] sm:$0xf]
        %v162 = vld [vmem:[%s142 + $0x40] sm:$0xf]
        %v163 = vld [vmem:[%s142 + $0x44] sm:$0xf]
        %v164 = vld [vmem:[%s142 + $0x48] sm:$0xf]
        %v165 = vld [vmem:[%s142 + $0x4c] sm:$0xf]
        %v166 = vld [vmem:[%s142 + $0x50] sm:$0xf]
        %v167 = vld [vmem:[%s142 + $0x54] sm:$0xf]
        %v168 = vld [vmem:[%s142 + $0x58] sm:$0xf]
        %v169 = vld [vmem:[%s142 + $0x5c] sm:$0xf]
        %v170 = vld [vmem:[%s142 + $0x60] sm:$0xf]
        %v171 = vld [vmem:[%s142 + $0x64] sm:$0xf]
        %v172 = vld [vmem:[%s142 + $0x68] sm:$0xf]
        %v173 = vld [vmem:[%s142 + $0x6c] sm:$0xf]
        %v174 = vld [vmem:[%s142 + $0x70] sm:$0xf]
        %v175 = vld [vmem:[%s142 + $0x74] sm:$0xf]
        %v176 = vld [vmem:[%s142 + $0x78] sm:$0xf]
        %v177 = vld [vmem:[%s142 + $0x7c] sm:$0xf]
        %v178 = vld [vmem:[%s1] sm:$0xf]
        %v179 = vld [vmem:[%s1 + $0x4] sm:$0xf]
        %v212 = vunpack.c.l.b16 %v146
        %v213 = vunpack.c.l.b16 %v147
        %v214 = vunpack.c.l.b16 %v148
        %v215 = vunpack.c.l.b16 %v149
        %v216 = vunpack.c.l.b16 %v150
        %v217 = vunpack.c.l.b16 %v151
        %v218 = vunpack.c.l.b16 %v152
        %v219 = vunpack.c.l.b16 %v153
        %v220 = vunpack.c.l.b16 %v154
        %v221 = vunpack.c.l.b16 %v155
        %v222 = vunpack.c.l.b16 %v156
        %v223 = vunpack.c.l.b16 %v157
        %v224 = vunpack.c.l.b16 %v158
        %v225 = vunpack.c.l.b16 %v159
        %v226 = vunpack.c.l.b16 %v160
        %v227 = vunpack.c.l.b16 %v161
        %v228 = vunpack.c.l.b16 %v162
        %v229 = vunpack.c.l.b16 %v163
        %v230 = vunpack.c.l.b16 %v164
        %v231 = vunpack.c.l.b16 %v165
        %v232 = vunpack.c.l.b16 %v166
        %v233 = vunpack.c.l.b16 %v167
        %v234 = vunpack.c.l.b16 %v168
        %v235 = vunpack.c.l.b16 %v169
        %v236 = vunpack.c.l.b16 %v170
        %v237 = vunpack.c.l.b16 %v171
        %v238 = vunpack.c.l.b16 %v172
        %v239 = vunpack.c.l.b16 %v173
        %v240 = vunpack.c.l.b16 %v174
        %v241 = vunpack.c.l.b16 %v175
        %v242 = vunpack.c.l.b16 %v176
        %v243 = vunpack.c.l.b16 %v177
        %v244 = vpack.c.b16 %v213, %v212
        %v245 = vpack.c.b16 %v215, %v214
        %v246 = vpack.c.b16 %v217, %v216
        %v247 = vpack.c.b16 %v219, %v218
        %v248 = vpack.c.b16 %v221, %v220
        %v249 = vpack.c.b16 %v223, %v222
        %v250 = vpack.c.b16 %v225, %v224
        %v251 = vpack.c.b16 %v227, %v226
        %v252 = vpack.c.b16 %v229, %v228
        %v253 = vpack.c.b16 %v231, %v230
        %v254 = vpack.c.b16 %v233, %v232
        %v255 = vpack.c.b16 %v235, %v234
        %v256 = vpack.c.b16 %v237, %v236
        %v257 = vpack.c.b16 %v239, %v238
        %v258 = vpack.c.b16 %v241, %v240
        %v259 = vpack.c.b16 %v243, %v242
        %v262 = vunpack.c.l.b16 %v178
        %v263 = vunpack.c.l.b16 %v179
        %v264 = vpack.c.b16 %v263, %v262
        %vm266 = vcmask 130048
        %v268 = vsel %vm266, %v244, 0
        %v271 = vsel %vm266, %v245, 0
        %v274 = vsel %vm266, %v246, 0
        %v277 = vsel %vm266, %v247, 0
        %v280 = vsel %vm266, %v248, 0
        %v283 = vsel %vm266, %v249, 0
        %v286 = vsel %vm266, %v250, 0
        %v289 = vsel %vm266, %v251, 0
        %v292 = vsel %vm266, %v252, 0
        %v295 = vsel %vm266, %v253, 0
        %v298 = vsel %vm266, %v254, 0
        %v301 = vsel %vm266, %v255, 0
        %v304 = vsel %vm266, %v256, 0
        %v307 = vsel %vm266, %v257, 0
        %v310 = vsel %vm266, %v258, 0
        %v313 = vsel %vm266, %v259, 0
        %315 = vmatprep.subr.bf16.mxu0 0
        %316 = vmatpush1.bf16.msra.mxu0 %v264
        %317 = vmatprep.subr.bf16.mxu0 0
        %318 = vmatpush1.bf16.msra.mxu0 0
        %319 = vmatprep.subr.bf16.mxu0 0
        %320 = vmatpush1.bf16.msra.mxu0 0
        %321 = vmatprep.subr.bf16.mxu0 0
        %322 = vmatpush1.bf16.msra.mxu0 0
        %323 = vmatprep.subr.bf16.mxu0 0
        %324 = vmatpush1.bf16.msra.mxu0 0
        %325 = vmatprep.subr.bf16.mxu0 0
        %326 = vmatpush1.bf16.msra.mxu0 0
        %327 = vmatprep.subr.bf16.mxu0 0
        %328 = vmatpush1.bf16.msra.mxu0 0
        %329 = vmatprep.subr.bf16.mxu0 0
        %330 = vmatpush1.bf16.msra.mxu0 0
        %331 = vmatprep.subr.bf16.mxu0 0
        %332 = vmatpush1.bf16.msra.mxu0 0
        %333 = vmatprep.subr.bf16.mxu0 0
        %334 = vmatpush1.bf16.msra.mxu0 0
        %335 = vmatprep.subr.bf16.mxu0 0
        %336 = vmatpush1.bf16.msra.mxu0 0
        %337 = vmatprep.subr.bf16.mxu0 0
        %338 = vmatpush1.bf16.msra.mxu0 0
        %339 = vmatprep.subr.bf16.mxu0 0
        %340 = vmatpush1.bf16.msra.mxu0 0
        %341 = vmatprep.subr.bf16.mxu0 0
        %342 = vmatpush1.bf16.msra.mxu0 0
        %343 = vmatprep.subr.bf16.mxu0 0
        %344 = vmatpush1.bf16.msra.mxu0 0
        %345 = vmatprep.subr.bf16.mxu0 0
        %346 = vmatpush1.bf16.msra.mxu0 0
        %347 = vmatprep.mubr.bf16.mxu0 0
        %348 = vmatmul.mubr.bf16.gmra.mrb[0].mxu0 %v268
        %v349 = vpop.f32.mrb[0].mxu0
        %v350 = vadd.f32 0.0, %v349
        %v351 = vpop.f32.mrb[0].mxu0
        %v352 = vpop.f32.mrb[0].mxu0
        %v353 = vadd.f32 0.0, %v352
        %v354 = vpop.f32.mrb[0].mxu0
        %355 = vmatprep.mubr.bf16.mxu0 0
        %356 = vmatmul.mubr.bf16.gmra.mrb[0].mxu0 %v271
        %v357 = vpop.f32.mrb[0].mxu0
        %v358 = vadd.f32 0.0, %v357
        %v359 = vpop.f32.mrb[0].mxu0
        %v360 = vpop.f32.mrb[0].mxu0
        %v361 = vadd.f32 0.0, %v360
        %v362 = vpop.f32.mrb[0].mxu0
        %363 = vmatprep.mubr.bf16.mxu0 0
        %364 = vmatmul.mubr.bf16.gmra.mrb[0].mxu0 %v274
        %v365 = vpop.f32.mrb[0].mxu0
        %v366 = vadd.f32 0.0, %v365
        %v367 = vpop.f32.mrb[0].mxu0
        %v368 = vpop.f32.mrb[0].mxu0
        %v369 = vadd.f32 0.0, %v368
        %v370 = vpop.f32.mrb[0].mxu0
        %371 = vmatprep.mubr.bf16.mxu0 0
        %372 = vmatmul.mubr.bf16.gmra.mrb[0].mxu0 %v277
        %v373 = vpop.f32.mrb[0].mxu0
        %v374 = vadd.f32 0.0, %v373
        %v375 = vpop.f32.mrb[0].mxu0
        %v376 = vpop.f32.mrb[0].mxu0
        %v377 = vadd.f32 0.0, %v376
        %v378 = vpop.f32.mrb[0].mxu0
        %379 = vmatprep.mubr.bf16.mxu0 0
        %380 = vmatmul.mubr.bf16.gmra.mrb[0].mxu0 %v280
        %v381 = vpop.f32.mrb[0].mxu0
        %v382 = vadd.f32 0.0, %v381
        %v383 = vpop.f32.mrb[0].mxu0
        %v384 = vpop.f32.mrb[0].mxu0
        %v385 = vadd.f32 0.0, %v384
        %v386 = vpop.f32.mrb[0].mxu0
        %387 = vmatprep.mubr.bf16.mxu0 0
        %388 = vmatmul.mubr.bf16.gmra.mrb[0].mxu0 %v283
        %v389 = vpop.f32.mrb[0].mxu0
        %v390 = vadd.f32 0.0, %v389
        %v391 = vpop.f32.mrb[0].mxu0
        %v392 = vpop.f32.mrb[0].mxu0
        %v393 = vadd.f32 0.0, %v392
        %v394 = vpop.f32.mrb[0].mxu0
        %395 = vmatprep.mubr.bf16.mxu0 0
        %396 = vmatmul.mubr.bf16.gmra.mrb[0].mxu0 %v286
        %v397 = vpop.f32.mrb[0].mxu0
        %v398 = vadd.f32 0.0, %v397
        %v399 = vpop.f32.mrb[0].mxu0
        %v400 = vpop.f32.mrb[0].mxu0
        %v401 = vadd.f32 0.0, %v400
        %v402 = vpop.f32.mrb[0].mxu0
        %403 = vmatprep.mubr.bf16.mxu0 0
        %404 = vmatmul.mubr.bf16.gmra.mrb[0].mxu0 %v289
        %v405 = vpop.f32.mrb[0].mxu0
        %v406 = vadd.f32 0.0, %v405
        %v407 = vpop.f32.mrb[0].mxu0
        %v408 = vpop.f32.mrb[0].mxu0
        %v409 = vadd.f32 0.0, %v408
        %v410 = vpop.f32.mrb[0].mxu0
        %411 = vmatprep.mubr.bf16.mxu0 0
        %412 = vmatmul.mubr.bf16.gmra.mrb[0].mxu0 %v292
        %v413 = vpop.f32.mrb[0].mxu0
        %v414 = vadd.f32 0.0, %v413
        %v415 = vpop.f32.mrb[0].mxu0
        %v416 = vpop.f32.mrb[0].mxu0
        %v417 = vadd.f32 0.0, %v416
        %v418 = vpop.f32.mrb[0].mxu0
        %419 = vmatprep.mubr.bf16.mxu0 0
        %420 = vmatmul.mubr.bf16.gmra.mrb[0].mxu0 %v295
        %v421 = vpop.f32.mrb[0].mxu0
        %v422 = vadd.f32 0.0, %v421
        %v423 = vpop.f32.mrb[0].mxu0
        %v424 = vpop.f32.mrb[0].mxu0
        %v425 = vadd.f32 0.0, %v424
        %v426 = vpop.f32.mrb[0].mxu0
        %427 = vmatprep.mubr.bf16.mxu0 0
        %428 = vmatmul.mubr.bf16.gmra.mrb[0].mxu0 %v298
        %v429 = vpop.f32.mrb[0].mxu0
        %v430 = vadd.f32 0.0, %v429
        %v431 = vpop.f32.mrb[0].mxu0
        %v432 = vpop.f32.mrb[0].mxu0
        %v433 = vadd.f32 0.0, %v432
        %v434 = vpop.f32.mrb[0].mxu0
        %435 = vmatprep.mubr.bf16.mxu0 0
        %436 = vmatmul.mubr.bf16.gmra.mrb[0].mxu0 %v301
        %v437 = vpop.f32.mrb[0].mxu0
        %v438 = vadd.f32 0.0, %v437
        %v439 = vpop.f32.mrb[0].mxu0
        %v440 = vpop.f32.mrb[0].mxu0
        %v441 = vadd.f32 0.0, %v440
        %v442 = vpop.f32.mrb[0].mxu0
        %443 = vmatprep.mubr.bf16.mxu0 0
        %444 = vmatmul.mubr.bf16.gmra.mrb[0].mxu0 %v304
        %v445 = vpop.f32.mrb[0].mxu0
        %v446 = vadd.f32 0.0, %v445
        %v447 = vpop.f32.mrb[0].mxu0
        %v448 = vpop.f32.mrb[0].mxu0
        %v449 = vadd.f32 0.0, %v448
        %v450 = vpop.f32.mrb[0].mxu0
        %451 = vmatprep.mubr.bf16.mxu0 0
        %452 = vmatmul.mubr.bf16.gmra.mrb[0].mxu0 %v307
        %v453 = vpop.f32.mrb[0].mxu0
        %v454 = vadd.f32 0.0, %v453
        %v455 = vpop.f32.mrb[0].mxu0
        %v456 = vpop.f32.mrb[0].mxu0
        %v457 = vadd.f32 0.0, %v456
        %v458 = vpop.f32.mrb[0].mxu0
        %459 = vmatprep.mubr.bf16.mxu0 0
        %460 = vmatmul.mubr.bf16.gmra.mrb[0].mxu0 %v310
        %v461 = vpop.f32.mrb[0].mxu0
        %v462 = vadd.f32 0.0, %v461
        %v463 = vpop.f32.mrb[0].mxu0
        %v464 = vpop.f32.mrb[0].mxu0
        %v465 = vadd.f32 0.0, %v464
        %v466 = vpop.f32.mrb[0].mxu0
        %467 = vmatprep.mubr.bf16.mxu0 0
        %468 = vmatmul.mubr.bf16.gmra.mrb[0].mxu0 %v313
        %v469 = vpop.f32.mrb[0].mxu0
        %v470 = vadd.f32 0.0, %v469
        %v471 = vpop.f32.mrb[0].mxu0
        %v472 = vpop.f32.mrb[0].mxu0
        %v473 = vadd.f32 0.0, %v472
        %v474 = vpop.f32.mrb[0].mxu0
        %475 = vdwg.mxu0
        %v476 = vpack.c.bf16 %v353, %v350
        %v477 = vpack.c.bf16 %v361, %v358
        %v478 = vpack.c.bf16 %v369, %v366
        %v479 = vpack.c.bf16 %v377, %v374
        %v480 = vpack.c.bf16 %v385, %v382
        %v481 = vpack.c.bf16 %v393, %v390
        %v482 = vpack.c.bf16 %v401, %v398
        %v483 = vpack.c.bf16 %v409, %v406
        %v484 = vpack.c.bf16 %v417, %v414
        %v485 = vpack.c.bf16 %v425, %v422
        %v486 = vpack.c.bf16 %v433, %v430
        %v487 = vpack.c.bf16 %v441, %v438
        %v488 = vpack.c.bf16 %v449, %v446
        %v489 = vpack.c.bf16 %v457, %v454
        %v490 = vpack.c.bf16 %v465, %v462
        %v491 = vpack.c.bf16 %v473, %v470
        %v508 = vunpack.c.l.b16 %v476
        %v509 = vunpack.c.h.b16 %v476
        %v510 = vunpack.c.l.b16 %v477
        %v511 = vunpack.c.h.b16 %v477
        %v512 = vunpack.c.l.b16 %v478
        %v513 = vunpack.c.h.b16 %v478
        %v514 = vunpack.c.l.b16 %v479
        %v515 = vunpack.c.h.b16 %v479
        %v516 = vunpack.c.l.b16 %v480
        %v517 = vunpack.c.h.b16 %v480
        %v518 = vunpack.c.l.b16 %v481
        %v519 = vunpack.c.h.b16 %v481
        %v520 = vunpack.c.l.b16 %v482
        %v521 = vunpack.c.h.b16 %v482
        %v522 = vunpack.c.l.b16 %v483
        %v523 = vunpack.c.h.b16 %v483
        %v524 = vunpack.c.l.b16 %v484
        %v525 = vunpack.c.h.b16 %v484
        %v526 = vunpack.c.l.b16 %v485
        %v527 = vunpack.c.h.b16 %v485
        %v528 = vunpack.c.l.b16 %v486
        %v529 = vunpack.c.h.b16 %v486
        %v530 = vunpack.c.l.b16 %v487
        %v531 = vunpack.c.h.b16 %v487
        %v532 = vunpack.c.l.b16 %v488
        %v533 = vunpack.c.h.b16 %v488
        %v534 = vunpack.c.l.b16 %v489
        %v535 = vunpack.c.h.b16 %v489
        %v536 = vunpack.c.l.b16 %v490
        %v537 = vunpack.c.h.b16 %v490
        %v538 = vunpack.c.l.b16 %v491
        %v539 = vunpack.c.h.b16 %v491
        %v540 = vpack.c.b16 %v508, %v508
        %v541 = vpack.c.b16 %v509, %v509
        %v542 = vpack.c.b16 %v510, %v510
        %v543 = vpack.c.b16 %v511, %v511
        %v544 = vpack.c.b16 %v512, %v512
        %v545 = vpack.c.b16 %v513, %v513
        %v546 = vpack.c.b16 %v514, %v514
        %v547 = vpack.c.b16 %v515, %v515
        %v548 = vpack.c.b16 %v516, %v516
        %v549 = vpack.c.b16 %v517, %v517
        %v550 = vpack.c.b16 %v518, %v518
        %v551 = vpack.c.b16 %v519, %v519
        %v552 = vpack.c.b16 %v520, %v520
        %v553 = vpack.c.b16 %v521, %v521
        %v554 = vpack.c.b16 %v522, %v522
        %v555 = vpack.c.b16 %v523, %v523
        %v556 = vpack.c.b16 %v524, %v524
        %v557 = vpack.c.b16 %v525, %v525
        %v558 = vpack.c.b16 %v526, %v526
        %v559 = vpack.c.b16 %v527, %v527
        %v560 = vpack.c.b16 %v528, %v528
        %v561 = vpack.c.b16 %v529, %v529
        %v562 = vpack.c.b16 %v530, %v530
        %v563 = vpack.c.b16 %v531, %v531
        %v564 = vpack.c.b16 %v532, %v532
        %v565 = vpack.c.b16 %v533, %v533
        %v566 = vpack.c.b16 %v534, %v534
        %v567 = vpack.c.b16 %v535, %v535
        %v568 = vpack.c.b16 %v536, %v536
        %v569 = vpack.c.b16 %v537, %v537
        %v570 = vpack.c.b16 %v538, %v538
        %v571 = vpack.c.b16 %v539, %v539
        %604 = vst [vmem:[%s137] sm:$0xf] %v540
        %605 = vst [vmem:[%s137 + $0x4] sm:$0xf] %v541
        %606 = vst [vmem:[%s137 + $0x8] sm:$0xf] %v542
        %607 = vst [vmem:[%s137 + $0xc] sm:$0xf] %v543
        %608 = vst [vmem:[%s137 + $0x10] sm:$0xf] %v544
        %609 = vst [vmem:[%s137 + $0x14] sm:$0xf] %v545
        %610 = vst [vmem:[%s137 + $0x18] sm:$0xf] %v546
        %611 = vst [vmem:[%s137 + $0x1c] sm:$0xf] %v547
        %612 = vst [vmem:[%s137 + $0x20] sm:$0xf] %v548
        %613 = vst [vmem:[%s137 + $0x24] sm:$0xf] %v549
        %614 = vst [vmem:[%s137 + $0x28] sm:$0xf] %v550
        %615 = vst [vmem:[%s137 + $0x2c] sm:$0xf] %v551
        %616 = vst [vmem:[%s137 + $0x30] sm:$0xf] %v552
        %617 = vst [vmem:[%s137 + $0x34] sm:$0xf] %v553
        %618 = vst [vmem:[%s137 + $0x38] sm:$0xf] %v554
        %619 = vst [vmem:[%s137 + $0x3c] sm:$0xf] %v555
        %620 = vst [vmem:[%s137 + $0x40] sm:$0xf] %v556
        %621 = vst [vmem:[%s137 + $0x44] sm:$0xf] %v557
        %622 = vst [vmem:[%s137 + $0x48] sm:$0xf] %v558
        %623 = vst [vmem:[%s137 + $0x4c] sm:$0xf] %v559
        %624 = vst [vmem:[%s137 + $0x50] sm:$0xf] %v560
        %625 = vst [vmem:[%s137 + $0x54] sm:$0xf] %v561
        %626 = vst [vmem:[%s137 + $0x58] sm:$0xf] %v562
        %627 = vst [vmem:[%s137 + $0x5c] sm:$0xf] %v563
        %628 = vst [vmem:[%s137 + $0x60] sm:$0xf] %v564
        %629 = vst [vmem:[%s137 + $0x64] sm:$0xf] %v565
        %630 = vst [vmem:[%s137 + $0x68] sm:$0xf] %v566
        %631 = vst [vmem:[%s137 + $0x6c] sm:$0xf] %v567
        %632 = vst [vmem:[%s137 + $0x70] sm:$0xf] %v568
        %633 = vst [vmem:[%s137 + $0x74] sm:$0xf] %v569
        %634 = vst [vmem:[%s137 + $0x78] sm:$0xf] %v570
        %635 = vst [vmem:[%s137 + $0x7c] sm:$0xf] %v571
        %s636 = sand.u32 %s71, 1
        %s637 = scalar_lea.sflag [#allocation3], %s636
        %s638 = sand.u32 %s71, 1
        %s639 = smul.addr %s638, 128
        %s640 = scalar_lea.vmem [#allocation2], %s639
        // Predicated region
        $region29: #{tpu_custom_call.1} parent=27 // pred_check
          %p641 = pneg %p81
        $region30: #{tpu_custom_call.1} parent=27 // pred_check_branch
          %643 = sbr.rel (%p641) target = $region32
        $region31: #{tpu_custom_call.1} parent=27 // pred_region
          %s644 = smul.u32 32, %s16
          %s646 = ssub.s32 2048, 2048
          %647 = vsyncadd %s637, %s646
          %s648 = smul.addr %s644, 64
          %s649 = scalar_lea.hbm %s2, %s648
          %s650 = sshll.u32 %s640, 4
          %s651 = int_to_ptr.vmem [resolvable:$true] %s650
          %656 = dma.vmem_to_hbm [thread:$0]  %s651, 2048, %s649, %s637, 64, 64, 4
        $region32: #{tpu_custom_call.1} parent=27 // pred_fallthru
          _
      $region28: #{tpu_custom_call.1} parent=5 // pred_fallthru
        _
      %p657 = scmp.le.s32.totalorder 2, %s11
      // Predicated region
      $region33: #{tpu_custom_call.1} parent=5 // pred_check
        %p658 = pneg %p657
      $region34: #{tpu_custom_call.1} parent=5 // pred_check_branch
        %660 = sbr.rel (%p658) target = $region36
      $region35: #{tpu_custom_call.1} parent=5 // pred_region
        %s661 = ssub.s32 %s11, 2
        // Predicated region
        $region37: #{tpu_custom_call.1} parent=35 // pred_check
          %p662 = pneg %p87
        $region38: #{tpu_custom_call.1} parent=35 // pred_check_branch
          %664 = sbr.rel (%p662) target = $region40
        $region39: #{tpu_custom_call.1} parent=35 // pred_region
          %s665 = sand.u32 %s72, 1
          %s666 = scalar_lea.sflag [#allocation3], %s665
          %s667 = sand.u32 %s72, 1
          %s668 = smul.addr %s667, 128
          %s669 = scalar_lea.vmem [#allocation2], %s668
          %670 = dma.done %s666, 2048
        $region40: #{tpu_custom_call.1} parent=35 // pred_fallthru
          _
      $region36: #{tpu_custom_call.1} parent=5 // pred_fallthru
        _
    $region6: #{tpu_custom_call.1} parent=1 // loop_footer
      %s15 = sadd.s32 1, %s11
    $region7: #{tpu_custom_call.1} parent=1 // loop_footer_branch
      %10 = sbr.rel target = $region3
    $region8: #{tpu_custom_call.1} parent=1 // loop_exit
      _
    %671 = vsyncpa [#allocation3], 1
    %s672 = scalar_lea.sflag [#allocation3], 1
    %673 = vsyncpa %s672, 1

</llo_original>
